<compile_context>
chip_gen: v7x
topology: tpu7x:2x2x1
jax: 0.10.0
libtpu: 0.0.40
codegen_flags: <defaults>
</compile_context>

<pallas_src>
import functools
import math

import jax
import jax.numpy as jnp
from jax import lax
from jax.experimental import pallas as pl
from jax.experimental.pallas import tpu as pltpu


def _round_up(n, m):
    return -(-n // m) * m


def _reduce_chunk(D):
    """Chunk length for the in-kernel D reduction (must divide D)."""
    if D <= 512:
        return D
    for c in (512, 256, 128):
        if D % c == 0:
            return c
    return D  # odd large D: single pass (the f32 temp is accounted in the budget)


def _gwl_kernel(x_ref, w_ref, b_ref, o_ref, *, chunk):
    # x_ref: (TB, TC, D) tile of batch rows
    # w_ref: (1, TC, D)  weights (grid-invariant when the class axis is untiled)
    # b_ref: (1, TC)     bias
    # o_ref: (TB, TC)    output tile
    tb, tc, d = x_ref.shape
    n_chunks = d // chunk

    if n_chunks <= 1:
        # Small D: single pass.  Multiply in the input dtype, accumulate in f32.
        acc = jnp.sum((x_ref[...] * w_ref[...]).astype(jnp.float32), axis=-1)
    else:
        # Chunked reduction over D: the f32 intermediate is only (TB, TC, chunk),
        # not the whole tile.
        def body(k, acc):
            start = pl.multiple_of(k * chunk, chunk)
            xs = x_ref[:, :, pl.ds(start, chunk)]
            ws = w_ref[:, :, pl.ds(start, chunk)]
            return acc + jnp.sum((xs * ws).astype(jnp.float32), axis=-1)

        acc = lax.fori_loop(0, n_chunks, body,
                            jnp.zeros((tb, tc), jnp.float32),
                            unroll=(n_chunks <= 8))

    o_ref[...] = (acc + b_ref[...].astype(jnp.float32)).astype(o_ref.dtype)


_DEFAULT_VMEM_CAPACITY = 64 * 1024 * 1024  # conservative (v7x per-TensorCore)


def _vmem_capacity_bytes():
    try:
        return int(pltpu.get_tpu_info().vmem_capacity_bytes)
    except Exception:
        return _DEFAULT_VMEM_CAPACITY


def _working_set_bytes(tb, tc, D, itemsize, chunk):
    """Resident VMEM for a (tb, tc) tile choice, including the reduction temp."""
    d_pad = _round_up(D, 128)           # lane padding of the last dim
    tc_lane = _round_up(tc, 128)        # lane padding when tc is the last dim
    x_bytes = 2 * tb * tc * d_pad * itemsize      # double-buffered x tiles
    w_bytes = 2 * tc * d_pad * itemsize           # W (worst case double-buffered)
    b_bytes = 2 * tc_lane * itemsize              # bias
    o_bytes = 2 * tb * tc_lane * itemsize         # double-buffered output tiles
    tmp_bytes = tb * tc * max(chunk, 128) * 4     # f32 per-chunk reduction temp
    return x_bytes + w_bytes + b_bytes + o_bytes + tmp_bytes


def _choose_tiles(B, C, D, itemsize):
    """Pick (tb, tc, chunk, vmem_capacity) from a generation-aware VMEM budget."""
    cap = _vmem_capacity_bytes()
    budget = int(cap * 0.45)            # target working-set size (leaves headroom)
    chunk = _reduce_chunk(D)

    def max_tb(tc):
        fixed = _working_set_bytes(0, tc, D, itemsize, chunk)
        per = _working_set_bytes(1, tc, D, itemsize, chunk) - fixed
        return (budget - fixed) // per

    tc = C
    if max_tb(C) < 1 and C > 128:
        # One full class-row is too big: tile the class axis in multiples of 128
        # (keeps the (TB, TC) output / (1, TC) bias blocks lane-aligned; Pallas
        # masks the partial last block).
        tc = (C // 128) * 128
        while tc > 128 and max_tb(tc) < min(8, B):
            tc -= 128
    # TODO(synk): if even a (min(8,B), 128, D) tile overflows VMEM (astronomically
    # large hidden_dim), add a D grid axis with an f32 accumulator + pl.when
    # init/finalize instead of the best-effort floor below.

    mt = max(max_tb(tc), 1)
    if mt >= B:
        if tc == C and B >= 16:
            # Always >= 2 batch blocks so both v7x TensorCores get work.
            tb = _round_up(-(-B // 2), 8)
        else:
            tb = B
    elif mt < 8:
        tb = min(8, B)
    else:
        tb = min((mt // 8) * 8, B)
    return int(tb), int(tc), int(chunk), int(cap)


def group_wise_linear(x, W, b):
    """x: (B, C, D), W: (1, C, D), b: (1, C) -> (B, C)."""
    B, C, D = x.shape
    assert W.shape == (1, C, D)
    assert b.shape == (1, C)

    # Keep the multiply on the native (e.g. bf16) VPU path on v6e/v7x and halve
    # W's DMA / resident footprint when params were created in f32.
    if W.dtype != x.dtype:
        W = W.astype(x.dtype)
    if b.dtype != x.dtype:
        b = b.astype(x.dtype)

    itemsize = x.dtype.itemsize
    tb, tc, chunk, cap = _choose_tiles(B, C, D, itemsize)
    nb = pl.cdiv(B, tb)
    nc = pl.cdiv(C, tc)
    grid = (nc, nb)  # class-tile outer, batch inner -> W stays resident per class tile

    needed = _working_set_bytes(tb, tc, D, itemsize, chunk)
    # Cap the scoped-VMEM request well below physical capacity (48 MiB on v7x's
    # 64 MiB per-TC VMEM, 96 MiB on v5e/v6e), but never below what we planned for.
    vmem_cap = int(cap * 0.75)
    vmem_limit = min(vmem_cap, max(32 * 1024 * 1024, int(needed * 1.4) + (2 << 20)))
    vmem_limit = max(vmem_limit, min(needed, vmem_cap))

    # W / bias are grid-invariant when the class axis is untiled -> single buffer.
    w_mode = pl.Buffered(1) if nc == 1 else None
    b_mode = pl.Buffered(1) if nc == 1 else None

    cost = pl.CostEstimate(
        flops=2 * B * C * D,
        transcendentals=0,
        bytes_accessed=x.nbytes + W.nbytes + b.nbytes + B * C * itemsize,
    )

    # NOTE: when D is not a multiple of 128 (small hidden_dim), the lane dim is
    # padded to 128 inside VMEM; this only matters for tiny configs where the
    # kernel is far from any roofline anyway.  Typical LCNet hidden_dim (2048)
    # is lane-aligned.
    kernel = functools.partial(_gwl_kernel, chunk=chunk)

    return pl.pallas_call(
        kernel,
        out_shape=jax.ShapeDtypeStruct((B, C), x.dtype),
        grid_spec=pltpu.PrefetchScalarGridSpec(
            num_scalar_prefetch=0,
            grid=grid,
            in_specs=[
                # x: (tb, tc, D) tile, double-buffered by default.
                pl.BlockSpec((tb, tc, D), lambda j, i: (i, j, 0)),
                # W / bias: depend only on the class-tile index.
                pl.BlockSpec((1, tc, D), lambda j, i: (0, j, 0),
                             pipeline_mode=w_mode),
                pl.BlockSpec((1, tc), lambda j, i: (0, j),
                             pipeline_mode=b_mode),
            ],
            out_specs=pl.BlockSpec((tb, tc), lambda j, i: (i, j)),
        ),
        compiler_params=pltpu.CompilerParams(
            dimension_semantics=("parallel", "parallel"),
            vmem_limit_bytes=int(vmem_limit),
        ),
        cost_estimate=cost,
    )(x, W, b)


def init_params(key, num_class, hidden_dim, dtype=jnp.float32):
    """Matches reset_parameters: U(-stdv, stdv), stdv = 1/sqrt(hidden_dim)."""
    stdv = 1.0 / math.sqrt(hidden_dim)
    kw, kb = jax.random.split(key)
    W = jax.random.uniform(kw, (1, num_class, hidden_dim), dtype, -stdv, stdv)
    b = jax.random.uniform(kb, (1, num_class), dtype, -stdv, stdv)
    return W, b


if __name__ == "__main__":
    B, num_class, hidden_dim = 2, 8, 32

    key = jax.random.PRNGKey(0)
    kx, kp = jax.random.split(key)
    x = jax.random.normal(kx, (B, num_class, hidden_dim), jnp.float32)
    W, b = init_params(kp, num_class, hidden_dim)

    out = group_wise_linear(x, W, b)
    out = jax.block_until_ready(out)

    # Reference in plain JAX (mirrors the PyTorch forward).
    ref = jnp.sum(W * x, axis=-1) + b
    assert out.shape == (B, num_class)
    assert jnp.allclose(out, ref, atol=1e-5, rtol=1e-5), "mismatch vs reference"

    print("KERNEL_OK")
</pallas_src>

<mosaic_0001>
module attributes {stable_mosaic.version = 11 : i64} {
  func.func @_gwl_kernel(%arg0: i32, %arg1: i32, %arg2: memref<2x8x32xf32, #tpu.memory_space<vmem>>, %arg3: memref<1x8x32xf32, #tpu.memory_space<vmem>>, %arg4: memref<1x8xf32, #tpu.memory_space<vmem>>, %arg5: memref<2x8xf32, #tpu.memory_space<vmem>>) attributes {dimension_semantics = [#tpu.dimension_semantics<parallel>, #tpu.dimension_semantics<parallel>], iteration_bounds = array<i64: 1, 1>, scalar_prefetch = 0 : i64, scratch_operands = 0 : i64, tpu.core_type = #tpu.core_type<tc>, window_params = [{transform_indices = @transform_0, window_bounds = array<i64: 2, 8, 32>}, {pipeline_mode = #tpu.pipeline_mode<synchronous>, transform_indices = @transform_1, window_bounds = array<i64: 1, 8, 32>}, {pipeline_mode = #tpu.pipeline_mode<synchronous>, transform_indices = @transform_2, window_bounds = array<i64: 1, 8>}, {transform_indices = @transform_3, window_bounds = array<i64: 2, 8>}]} {
    %c0 = arith.constant 0 : index
    %c0_0 = arith.constant 0 : index
    %c0_1 = arith.constant 0 : index
    %0 = vector.load %arg2[%c0, %c0_0, %c0_1] : memref<2x8x32xf32, #tpu.memory_space<vmem>>, vector<2x8x32xf32>
    %c0_2 = arith.constant 0 : index
    %c0_3 = arith.constant 0 : index
    %c0_4 = arith.constant 0 : index
    %1 = vector.load %arg3[%c0_2, %c0_3, %c0_4] : memref<1x8x32xf32, #tpu.memory_space<vmem>>, vector<1x8x32xf32>
    %2 = vector.broadcast %1 : vector<1x8x32xf32> to vector<2x8x32xf32>
    %3 = arith.mulf %0, %2 : vector<2x8x32xf32>
    %cst = arith.constant dense<0.000000e+00> : vector<2x8xf32>
    %4 = vector.multi_reduction <add>, %3, %cst [2] : vector<2x8x32xf32> to vector<2x8xf32>
    %c0_5 = arith.constant 0 : index
    %c0_6 = arith.constant 0 : index
    %5 = vector.load %arg4[%c0_5, %c0_6] : memref<1x8xf32, #tpu.memory_space<vmem>>, vector<1x8xf32>
    %6 = vector.broadcast %5 : vector<1x8xf32> to vector<2x8xf32>
    %7 = arith.addf %4, %6 : vector<2x8xf32>
    %c0_7 = arith.constant 0 : index
    %c0_8 = arith.constant 0 : index
    %8 = vector.load %arg5[%c0_7, %c0_8] : memref<2x8xf32, #tpu.memory_space<vmem>>, vector<2x8xf32>
    tpu.vector_store %arg5[%c0_7, %c0_8], %7 {strides = array<i32>} : memref<2x8xf32, #tpu.memory_space<vmem>>, vector<2x8xf32>,
    return
  }
  func.func @transform_0(%arg0: i32, %arg1: i32) -> (i32, i32, i32) {
    %c0_i32 = arith.constant 0 : i32
    %c0_i32_0 = arith.constant 0 : i32
    return %arg1, %arg0, %c0_i32 : i32, i32, i32
  }
  func.func @transform_1(%arg0: i32, %arg1: i32) -> (i32, i32, i32) {
    %c0_i32 = arith.constant 0 : i32
    %c0_i32_0 = arith.constant 0 : i32
    %c0_i32_1 = arith.constant 0 : i32
    return %c0_i32, %arg0, %c0_i32_0 : i32, i32, i32
  }
  func.func @transform_2(%arg0: i32, %arg1: i32) -> (i32, i32) {
    %c0_i32 = arith.constant 0 : i32
    %c0_i32_0 = arith.constant 0 : i32
    return %c0_i32, %arg0 : i32, i32
  }
  func.func @transform_3(%arg0: i32, %arg1: i32) -> (i32, i32) {
    %c0_i32 = arith.constant 0 : i32
    return %arg1, %arg0 : i32, i32
  }
}

</mosaic_0001>

<llo_original>
// kernel: tpu_custom_call.1
$region0: #{tpu_custom_call.1}
  #allocation0 [shape = 'u32[]', space=smem, size = 0x4, offset = 0x4, fixed_abs, tag = 'smem constant byte address 0x4 - core index']
  #allocation1 [shape = 'u32[144,128]{1,0:T(1,128)}', space=vmem, size = 0x12000, scoped, tag = 'internal scratch']
  %s0 = inlined_call_operand.hbm [shape: f32[2,8,32], index: 0, kind: input, shape index: {}]
  %s1 = inlined_call_operand.hbm [shape: f32[1,8,32], index: 1, kind: input, shape index: {}]
  %s2 = inlined_call_operand.vmem [shape: f32[1,8], index: 2, kind: input, shape index: {}]
  %s3 = inlined_call_operand.hbm [shape: f32[2,8], index: 3, kind: output, shape index: {}]
  %s4 = sld [smem:[#allocation0]]
  $region30: #{tpu_custom_call.1} parent=0
    _
  %s6 = ssub.s32 1, %s4
  %s7 = scalar_select 0, %s6, %s4
  $region1: #{tpu_custom_call.1} parent=0
    #allocation2 [shape = 'u8[8192]{0}', space=vmem, size = 0x2000, scoped, tag = 'input window, operand 0, single buffered']
    #allocation3 [shape = 's32[1]{0}', space=sflag, size = 0x4, scoped, tag = 'scoped memory for tpu_custom_call.1']
    #allocation4 [shape = 's32[1]{0}', space=sflag, size = 0x4, scoped, tag = 'scoped memory for tpu_custom_call.1']
    #allocation5 [shape = 'u8[4096]{0}', space=vmem, size = 0x1000, scoped, tag = 'input window, operand 1, single buffered']
    #allocation6 [shape = 's32[1]{0}', space=sflag, size = 0x4, scoped, tag = 'scoped memory for tpu_custom_call.1']
    #allocation7 [shape = 'u8[1024]{0}', space=vmem, size = 0x400, scoped, tag = 'output window, operand 0, single buffered']
    %8 = vsyncpa [#allocation3], 0
    %9 = vsyncpa [#allocation6], 0
    %10 = vsyncpa [#allocation4], 0
    // Predicated region
    $region2: #{tpu_custom_call.1} parent=1 // pred_check
      _
    $region3: #{tpu_custom_call.1} parent=1 // pred_check_branch
      %12 = sbr.rel (0) target = $region5
    $region4: #{tpu_custom_call.1} parent=1 // pred_region
      %s14 = ssub.s32 256, 256
      %15 = vsyncadd [#allocation3], %s14
      %s16 = sshll.u32 [#allocation2], 4
      %s17 = int_to_ptr.vmem [resolvable:$true] %s16
      %22 = dma.hbm_to_vmem [thread:$0]  %s0, 256, %s17, [#allocation3], 128, 128, 8
    $region5: #{tpu_custom_call.1} parent=1 // pred_fallthru
      _
    // Predicated region
    $region6: #{tpu_custom_call.1} parent=1 // pred_check
      _
    $region7: #{tpu_custom_call.1} parent=1 // pred_check_branch
      %24 = sbr.rel (0) target = $region9
    $region8: #{tpu_custom_call.1} parent=1 // pred_region
      %s26 = ssub.s32 128, 128
      %27 = vsyncadd [#allocation6], %s26
      %s29 = sshll.u32 [#allocation5], 4
      %s30 = int_to_ptr.vmem [resolvable:$true] %s29
      %32 = dma.hbm_to_vmem [thread:$0]  %s1, 128, %s30, [#allocation6]
    $region9: #{tpu_custom_call.1} parent=1 // pred_fallthru
      _
    // Predicated region
    $region10: #{tpu_custom_call.1} parent=1 // pred_check
      _
    $region11: #{tpu_custom_call.1} parent=1 // pred_check_branch
      %34 = sbr.rel (0) target = $region13
    $region12: #{tpu_custom_call.1} parent=1 // pred_region
      _
    $region13: #{tpu_custom_call.1} parent=1 // pred_fallthru
      _
    // Predicated region
    $region14: #{tpu_custom_call.1} parent=1 // pred_check
      _
    $region15: #{tpu_custom_call.1} parent=1 // pred_check_branch
      %36 = sbr.rel (0) target = $region17
    $region16: #{tpu_custom_call.1} parent=1 // pred_region
      %37 = dma.done [#allocation3], 256
    $region17: #{tpu_custom_call.1} parent=1 // pred_fallthru
      _
    // Predicated region
    $region18: #{tpu_custom_call.1} parent=1 // pred_check
      _
    $region19: #{tpu_custom_call.1} parent=1 // pred_check_branch
      %39 = sbr.rel (0) target = $region21
    $region20: #{tpu_custom_call.1} parent=1 // pred_region
      %40 = dma.done [#allocation6], 128
    $region21: #{tpu_custom_call.1} parent=1 // pred_fallthru
      _
    %v41 = vld [vmem:[#allocation2] sm:$0xff]
    %v42 = vld [vmem:[#allocation2 + $0x8] sm:$0xff]
    %v43 = vld [vmem:[#allocation5] sm:$0xff]
    %v44 = vmul.f32 %v41, %v43
    %v45 = vmul.f32 %v42, %v43
    %vm46 = vcmask 261120
    %v47 = vsel %vm46, %v44, 0.0
    %48 = vadd.xlane.f32.xlu0 %v47
    %v49 = vpop.xlane.xlu0 %48
    %v50 = vsel %vm46, %v45, 0.0
    %51 = vadd.xlane.f32.xlu0 %v50
    %v52 = vpop.xlane.xlu0 %51
    %v53 = vld [vmem:[%s2] sm:$0x1]
    %v55 = vlaneseq
    %v56 = vshrl.u32 %v55, 7
    %v57 = vsub.s32 0, %v56
    %v58 = vrot.slane %v53, %v57
    %60 = vbcast.lane.b32.xlu0 %v58, 256
    %v61 = vpop.permute.xlu0 %60
    %v63 = vadd.f32 %v49, %v61
    %v64 = vadd.f32 %v52, %v61
    %67 = vset.pattern.permute.xlu0 0
    %68 = vperm.xlu0 %67, %v63
    %v69 = vpop.permute.xlu0 %68
    %70 = vset.pattern.permute.xlu0 0
    %71 = vperm.xlu0 %70, %v64
    %v72 = vpop.permute.xlu0 %71
    %v73 = vlaneseq
    %v74 = vand.u32 %v73, 127
    %v75 = vlaneseq
    %v76 = vshrl.u32 %v75, 7
    %v77 = vsub.s32 %v74, %v76
    %v78 = vrot.slane %v69, %v77
    %v79 = vlaneseq
    %v80 = vshrl.u32 %v79, 7
    %v81 = vsub.s32 %v74, %v80
    %v82 = vrot.slane %v72, %v81
    %vm83 = vcmask 1041409
    %v84 = vsel %vm83, %v82, %v78
    %vm86 = vcmask 58368
    %87 = vst.msk [vmem:[#allocation7] sm:$0x3] %vm86, %v84
    // Predicated region
    $region22: #{tpu_custom_call.1} parent=1 // pred_check
      _
    $region23: #{tpu_custom_call.1} parent=1 // pred_check_branch
      %89 = sbr.rel (0) target = $region25
    $region24: #{tpu_custom_call.1} parent=1 // pred_region
      %s91 = ssub.s32 32, 32
      %92 = vsyncadd [#allocation4], %s91
      %s94 = sshll.u32 [#allocation7], 4
      %s95 = int_to_ptr.vmem [resolvable:$true] %s94
      %97 = dma.vmem_to_hbm [thread:$0]  %s95, 32, %s3, [#allocation4]
    $region25: #{tpu_custom_call.1} parent=1 // pred_fallthru
      _
    // Predicated region
    $region26: #{tpu_custom_call.1} parent=1 // pred_check
      _
    $region27: #{tpu_custom_call.1} parent=1 // pred_check_branch
      %99 = sbr.rel (0) target = $region29
    $region28: #{tpu_custom_call.1} parent=1 // pred_region
      %100 = dma.done [#allocation4], 32
    $region29: #{tpu_custom_call.1} parent=1 // pred_fallthru
      _
    %101 = vsyncpa [#allocation3], 1
    %102 = vsyncpa [#allocation6], 1
    %103 = vsyncpa [#allocation4], 1

</llo_original>
